<compile_context>
chip_gen: v6e
topology: v6e:2x2x1
jax: 0.10.0
libtpu: 0.0.40
codegen_flags: <defaults>
</compile_context>

<pallas_src>
import jax
import jax.numpy as jnp
from jax.experimental import pallas as pl
from jax.experimental.pallas import tpu as pltpu

HIDDEN = 30        # logical hidden width of the PyTorch module
H_PAD = 32         # padded to a whole 4-sublane strip; padded rows are zero
MAX_TILE_B = 16384 # lane-dense batch tile (multiple of 512)


def _round_up(x, m):
    return ((x + m - 1) // m) * m


def _choose_tile(batch):
    """Pick the batch tile: large (grid-step overhead dominates small tiles),
    a multiple of 512 (fills a 256-wide MXU pass), and -- when more than one
    tile is needed -- an even tile count so v7x's two TensorCores both run."""
    if batch <= 512:
        return batch                       # single block == full array dims
    n = max(2, pl.cdiv(batch, MAX_TILE_B))
    if n % 2:
        n += 1
    return _round_up(pl.cdiv(batch, n), 512)


def cnet_kernel(s_ref, a_ref, ws_ref, wa_ref, b_ref, wo_ref, bo_ref, out_ref):
    # Fused hidden layer, feature-major: two small MXU pushes -> (H_PAD, TILE_B) f32.
    h = jnp.dot(ws_ref[...], s_ref[...], preferred_element_type=jnp.float32)
    h = h + jnp.dot(wa_ref[...], a_ref[...], preferred_element_type=jnp.float32)
    # Bias + relu in f32 (v5e VPU has no bf16); bias (H_PAD, 1) broadcasts on lanes.
    net = jnp.maximum(h + b_ref[...], 0.0)
    # Output layer 30->1: VPU multiply + XLU sublane reduce (exact: padded rows
    # of wo are zero).  bo is an SMEM scalar.
    out = jnp.sum(net * wo_ref[...], axis=0, keepdims=True) + bo_ref[0, 0]
    out_ref[...] = out.astype(out_ref.dtype)      # (1, TILE_B): lane-dense store


def cnet_forward(s, a, params):
    """CNet forward: s (B, s_dim) f32, a (B, a_dim) f32 -> (B, 1) f32."""
    ws, wa, b, wo, bo = params
    B, s_dim = s.shape
    a_dim = a.shape[1]

    # Wrapper-side layout plumbing only: one fused bf16-cast + transpose per
    # input, no concat and no batch padding (ragged tails via the cdiv grid).
    s_t = s.astype(jnp.bfloat16).T        # (s_dim, B)
    a_t = a.astype(jnp.bfloat16).T        # (a_dim, B)

    tile = _choose_tile(B)
    grid = (pl.cdiv(B, tile),)

    out = pl.pallas_call(
        cnet_kernel,
        out_shape=jax.ShapeDtypeStruct((1, B), jnp.float32),
        grid=grid,
        in_specs=[
            pl.BlockSpec((s_dim, tile), lambda i: (0, i)),      # batch-tiled state
            pl.BlockSpec((a_dim, tile), lambda i: (0, i)),      # batch-tiled action
            pl.BlockSpec((H_PAD, s_dim), lambda i: (0, 0)),     # resident bf16 weights
            pl.BlockSpec((H_PAD, a_dim), lambda i: (0, 0)),
            pl.BlockSpec((H_PAD, 1), lambda i: (0, 0)),         # fused hidden bias
            pl.BlockSpec((H_PAD, 1), lambda i: (0, 0)),         # output weight column
            pl.BlockSpec(memory_space=pltpu.MemorySpace.SMEM),  # output bias scalar
        ],
        out_specs=pl.BlockSpec((1, tile), lambda i: (0, i)),
        compiler_params=pltpu.CompilerParams(
            dimension_semantics=("parallel",),      # shard tiles across v7x's 2 TCs
            vmem_limit_bytes=48 * 1024 * 1024,      # explicit budget < v7x's 64 MiB
        ),
    )(s_t, a_t, ws, wa, b, wo, bo)

    # (1, B) -> (B, 1): degenerate-axis transpose, no data shuffle.
    return out.T


def pack_params(ws, bs, wa, ba, wo, bo):
    """Pack PyTorch-style params (weights (out,in), biases (out,)) for the kernel.
    Hidden dim is zero-padded 30 -> 32 so the sublane strip is unmasked; the
    padded rows of wo are zero so the reduce stays exact."""
    pad = H_PAD - HIDDEN
    ws_p = jnp.pad(ws, ((0, pad), (0, 0))).astype(jnp.bfloat16)       # (32, s_dim)
    wa_p = jnp.pad(wa, ((0, pad), (0, 0))).astype(jnp.bfloat16)       # (32, a_dim)
    b_p = jnp.pad(bs + ba, (0, pad)).reshape(H_PAD, 1).astype(jnp.float32)
    wo_p = jnp.pad(wo.reshape(-1), (0, pad)).reshape(H_PAD, 1).astype(jnp.float32)
    bo_s = bo.reshape(1, 1).astype(jnp.float32)                       # SMEM scalar
    return ws_p, wa_p, b_p, wo_p, bo_s


def init_params(key, s_dim, a_dim):
    """Mirror the PyTorch module: weights ~ N(0, 0.1); biases ~ PyTorch default
    U(-1/sqrt(fan_in), 1/sqrt(fan_in))."""
    ks = jax.random.split(key, 6)
    ws = 0.1 * jax.random.normal(ks[0], (HIDDEN, s_dim), jnp.float32)
    wa = 0.1 * jax.random.normal(ks[1], (HIDDEN, a_dim), jnp.float32)
    wo = 0.1 * jax.random.normal(ks[2], (1, HIDDEN), jnp.float32)
    bs = jax.random.uniform(ks[3], (HIDDEN,), jnp.float32,
                            -1.0 / jnp.sqrt(s_dim), 1.0 / jnp.sqrt(s_dim))
    ba = jax.random.uniform(ks[4], (HIDDEN,), jnp.float32,
                            -1.0 / jnp.sqrt(a_dim), 1.0 / jnp.sqrt(a_dim))
    bo = jax.random.uniform(ks[5], (1,), jnp.float32,
                            -1.0 / jnp.sqrt(HIDDEN), 1.0 / jnp.sqrt(HIDDEN))
    return pack_params(ws, bs, wa, ba, wo, bo)


def reference_forward(s, a, params):
    """Pure-JAX reference using the same bf16-quantized inputs/weights, f32 math."""
    ws, wa, b, wo, bo = params
    s_q = s.astype(jnp.bfloat16).astype(jnp.float32)
    a_q = a.astype(jnp.bfloat16).astype(jnp.float32)
    h = s_q @ ws.astype(jnp.float32).T + a_q @ wa.astype(jnp.float32).T + b[:, 0]
    net = jnp.maximum(h, 0.0)             # (B, 32); padded cols are relu(0) = 0
    return net @ wo + bo[0, 0]            # (B, 1)


if __name__ == "__main__":
    key = jax.random.PRNGKey(0)
    B, S_DIM, A_DIM = 2, 16, 4

    k_s, k_a, k_p = jax.random.split(key, 3)
    s = jax.random.normal(k_s, (B, S_DIM), jnp.float32)
    a = jax.random.normal(k_a, (B, A_DIM), jnp.float32)
    params = init_params(k_p, S_DIM, A_DIM)

    out = jax.block_until_ready(cnet_forward(s, a, params))
    ref = reference_forward(s, a, params)

    assert out.shape == (B, 1), out.shape
    assert jnp.allclose(out, ref, atol=1e-2, rtol=1e-2), (out, ref)

    print("KERNEL_OK")
</pallas_src>

<mosaic_0001>
module attributes {stable_mosaic.version = 11 : i64} {
  func.func @cnet_kernel(%arg0: i32, %arg1: memref<16x2xbf16, #tpu.memory_space<vmem>>, %arg2: memref<4x2xbf16, #tpu.memory_space<vmem>>, %arg3: memref<32x16xbf16, #tpu.memory_space<vmem>>, %arg4: memref<32x4xbf16, #tpu.memory_space<vmem>>, %arg5: memref<32x1xf32, #tpu.memory_space<vmem>>, %arg6: memref<32x1xf32, #tpu.memory_space<vmem>>, %arg7: memref<1x1xf32, #tpu.memory_space<smem>>, %arg8: memref<1x2xf32, #tpu.memory_space<vmem>>) attributes {dimension_semantics = [#tpu.dimension_semantics<parallel>], iteration_bounds = array<i64: 1>, scalar_prefetch = 0 : i64, scratch_operands = 0 : i64, tpu.core_type = #tpu.core_type<tc>, window_params = [{transform_indices = @transform_0, window_bounds = array<i64: 16, 2>}, {transform_indices = @transform_1, window_bounds = array<i64: 4, 2>}, {pipeline_mode = #tpu.pipeline_mode<synchronous>, transform_indices = @transform_2, window_bounds = array<i64: 32, 16>}, {pipeline_mode = #tpu.pipeline_mode<synchronous>, transform_indices = @transform_3, window_bounds = array<i64: 32, 4>}, {pipeline_mode = #tpu.pipeline_mode<synchronous>, transform_indices = @transform_4, window_bounds = array<i64: 32, 1>}, {pipeline_mode = #tpu.pipeline_mode<synchronous>, transform_indices = @transform_5, window_bounds = array<i64: 32, 1>}, {transform_indices = @transform_6, window_bounds = array<i64: 1, 1>}, {transform_indices = @transform_7, window_bounds = array<i64: 1, 2>}]} {
    %c0 = arith.constant 0 : index
    %c0_0 = arith.constant 0 : index
    %0 = vector.load %arg3[%c0, %c0_0] : memref<32x16xbf16, #tpu.memory_space<vmem>>, vector<32x16xbf16>
    %c0_1 = arith.constant 0 : index
    %c0_2 = arith.constant 0 : index
    %1 = vector.load %arg1[%c0_1, %c0_2] : memref<16x2xbf16, #tpu.memory_space<vmem>>, vector<16x2xbf16>
    %cst = arith.constant dense<0.000000e+00> : vector<32x2xf32>
    %2 = tpu.matmul %0, %1, %cst {dimension_numbers = #tpu.dot_dimension_numbers<[1], [0], [0], [1], [0, 0, 1, 1], [], []>} : vector<32x16xbf16>, vector<16x2xbf16>, vector<32x2xf32> -> vector<32x2xf32>
    %c0_3 = arith.constant 0 : index
    %c0_4 = arith.constant 0 : index
    %3 = vector.load %arg4[%c0_3, %c0_4] : memref<32x4xbf16, #tpu.memory_space<vmem>>, vector<32x4xbf16>
    %c0_5 = arith.constant 0 : index
    %c0_6 = arith.constant 0 : index
    %4 = vector.load %arg2[%c0_5, %c0_6] : memref<4x2xbf16, #tpu.memory_space<vmem>>, vector<4x2xbf16>
    %cst_7 = arith.constant dense<0.000000e+00> : vector<32x2xf32>
    %5 = tpu.matmul %3, %4, %cst_7 {dimension_numbers = #tpu.dot_dimension_numbers<[1], [0], [0], [1], [0, 0, 1, 1], [], []>} : vector<32x4xbf16>, vector<4x2xbf16>, vector<32x2xf32> -> vector<32x2xf32>
    %6 = arith.addf %2, %5 : vector<32x2xf32>
    %c0_8 = arith.constant 0 : index
    %c0_9 = arith.constant 0 : index
    %7 = vector.load %arg5[%c0_8, %c0_9] : memref<32x1xf32, #tpu.memory_space<vmem>>, vector<32x1xf32>
    %8 = vector.broadcast %7 : vector<32x1xf32> to vector<32x2xf32>
    %9 = arith.addf %6, %8 : vector<32x2xf32>
    %cst_10 = arith.constant 0.000000e+00 : f32
    %10 = vector.broadcast %cst_10 : f32 to vector<32x2xf32>
    %11 = arith.maximumf %9, %10 : vector<32x2xf32>
    %c0_11 = arith.constant 0 : index
    %c0_12 = arith.constant 0 : index
    %12 = vector.load %arg6[%c0_11, %c0_12] : memref<32x1xf32, #tpu.memory_space<vmem>>, vector<32x1xf32>
    %13 = vector.broadcast %12 : vector<32x1xf32> to vector<32x2xf32>
    %14 = arith.mulf %11, %13 : vector<32x2xf32>
    %cst_13 = arith.constant dense<0.000000e+00> : vector<2xf32>
    %15 = vector.multi_reduction <add>, %14, %cst_13 [0] : vector<32x2xf32> to vector<2xf32>
    %16 = vector.shape_cast %15 : vector<2xf32> to vector<1x2xf32>
    %c0_14 = arith.constant 0 : index
    %c0_15 = arith.constant 0 : index
    %17 = memref.load %arg7[%c0_14, %c0_15] : memref<1x1xf32, #tpu.memory_space<smem>>
    %18 = vector.broadcast %17 : f32 to vector<1x2xf32>
    %19 = arith.addf %16, %18 : vector<1x2xf32>
    %c0_16 = arith.constant 0 : index
    %c0_17 = arith.constant 0 : index
    %20 = vector.load %arg8[%c0_16, %c0_17] : memref<1x2xf32, #tpu.memory_space<vmem>>, vector<1x2xf32>
    tpu.vector_store %arg8[%c0_16, %c0_17], %19 {strides = array<i32>} : memref<1x2xf32, #tpu.memory_space<vmem>>, vector<1x2xf32>,
    return
  }
  func.func @transform_0(%arg0: i32) -> (i32, i32) {
    %c0_i32 = arith.constant 0 : i32
    %c0_i32_0 = arith.constant 0 : i32
    return %c0_i32, %arg0 : i32, i32
  }
  func.func @transform_1(%arg0: i32) -> (i32, i32) {
    %c0_i32 = arith.constant 0 : i32
    %c0_i32_0 = arith.constant 0 : i32
    return %c0_i32, %arg0 : i32, i32
  }
  func.func @transform_2(%arg0: i32) -> (i32, i32) {
    %c0_i32 = arith.constant 0 : i32
    %c0_i32_0 = arith.constant 0 : i32
    %c0_i32_1 = arith.constant 0 : i32
    return %c0_i32, %c0_i32_0 : i32, i32
  }
  func.func @transform_3(%arg0: i32) -> (i32, i32) {
    %c0_i32 = arith.constant 0 : i32
    %c0_i32_0 = arith.constant 0 : i32
    %c0_i32_1 = arith.constant 0 : i32
    return %c0_i32, %c0_i32_0 : i32, i32
  }
  func.func @transform_4(%arg0: i32) -> (i32, i32) {
    %c0_i32 = arith.constant 0 : i32
    %c0_i32_0 = arith.constant 0 : i32
    %c0_i32_1 = arith.constant 0 : i32
    return %c0_i32, %c0_i32_0 : i32, i32
  }
  func.func @transform_5(%arg0: i32) -> (i32, i32) {
    %c0_i32 = arith.constant 0 : i32
    %c0_i32_0 = arith.constant 0 : i32
    %c0_i32_1 = arith.constant 0 : i32
    return %c0_i32, %c0_i32_0 : i32, i32
  }
  func.func @transform_6(%arg0: i32) -> (i32, i32) {
    %c0_i32 = arith.constant 0 : i32
    %c0_i32_0 = arith.constant 0 : i32
    %c0_i32_1 = arith.constant 0 : i32
    return %c0_i32, %c0_i32_0 : i32, i32
  }
  func.func @transform_7(%arg0: i32) -> (i32, i32) {
    %c0_i32 = arith.constant 0 : i32
    %c0_i32_0 = arith.constant 0 : i32
    return %c0_i32, %arg0 : i32, i32
  }
}

</mosaic_0001>

<llo_original>
// kernel: tpu_custom_call.1
$region0: #{tpu_custom_call.1}
  #allocation0 [shape = 'u32[]', space=smem, size = 0x4, offset = 0x4, fixed_abs, tag = 'smem constant byte address 0x4 - core index']
  #allocation1 [shape = 'u32[144,128]{1,0:T(1,128)}', space=vmem, size = 0x12000, scoped, tag = 'internal scratch']
  #allocation2 [shape = 'f32[1,1]{1,0:T(1,128)S(6)}', space=smem, size = 0x200, scoped, tag = 'scoped memory for tpu_custom_call.1']
  %s0 = inlined_call_operand.vmem [shape: bf16[16,2], index: 0, kind: input, shape index: {}]
  %s1 = inlined_call_operand.vmem [shape: bf16[4,2], index: 1, kind: input, shape index: {}]
  %s2 = inlined_call_operand.vmem [shape: bf16[32,16], index: 2, kind: input, shape index: {}]
  %s3 = inlined_call_operand.vmem [shape: bf16[32,4], index: 3, kind: input, shape index: {}]
  %s4 = inlined_call_operand.vmem [shape: f32[32,1], index: 4, kind: input, shape index: {}]
  %s5 = inlined_call_operand.vmem [shape: f32[32,1], index: 5, kind: input, shape index: {}]
  %s6 = inlined_call_operand.<no memory space> [shape: f32[1,1], index: 6, kind: input, shape index: {}]
  %s7 = inlined_call_operand.hbm [shape: f32[1,2], index: 7, kind: output, shape index: {}]
  %s8 = sld [smem:[#allocation0]]
  $region38: #{tpu_custom_call.1} parent=0
    _
  %s10 = ssub.s32 1, %s8
  %s11 = scalar_select 0, %s10, %s8
  %12 = sst [smem:[#allocation2]] %s6
  $region1: #{tpu_custom_call.1} parent=0
    #allocation3 [shape = 'u8[512]{0}', space=vmem, size = 0x400, scoped, tag = 'output window, operand 0, single buffered']
    #allocation4 [shape = 's32[1]{0}', space=sflag, size = 0x4, scoped, tag = 'scoped memory for tpu_custom_call.1']
    %13 = vsyncpa [#allocation4], 0
    // Predicated region
    $region2: #{tpu_custom_call.1} parent=1 // pred_check
      _
    $region3: #{tpu_custom_call.1} parent=1 // pred_check_branch
      %15 = sbr.rel (0) target = $region5
    $region4: #{tpu_custom_call.1} parent=1 // pred_region
      _
    $region5: #{tpu_custom_call.1} parent=1 // pred_fallthru
      _
    // Predicated region
    $region6: #{tpu_custom_call.1} parent=1 // pred_check
      _
    $region7: #{tpu_custom_call.1} parent=1 // pred_check_branch
      %17 = sbr.rel (0) target = $region9
    $region8: #{tpu_custom_call.1} parent=1 // pred_region
      _
    $region9: #{tpu_custom_call.1} parent=1 // pred_fallthru
      _
    // Predicated region
    $region10: #{tpu_custom_call.1} parent=1 // pred_check
      _
    $region11: #{tpu_custom_call.1} parent=1 // pred_check_branch
      %19 = sbr.rel (0) target = $region13
    $region12: #{tpu_custom_call.1} parent=1 // pred_region
      _
    $region13: #{tpu_custom_call.1} parent=1 // pred_fallthru
      _
    // Predicated region
    $region14: #{tpu_custom_call.1} parent=1 // pred_check
      _
    $region15: #{tpu_custom_call.1} parent=1 // pred_check_branch
      %21 = sbr.rel (0) target = $region17
    $region16: #{tpu_custom_call.1} parent=1 // pred_region
      _
    $region17: #{tpu_custom_call.1} parent=1 // pred_fallthru
      _
    // Predicated region
    $region18: #{tpu_custom_call.1} parent=1 // pred_check
      _
    $region19: #{tpu_custom_call.1} parent=1 // pred_check_branch
      %23 = sbr.rel (0) target = $region21
    $region20: #{tpu_custom_call.1} parent=1 // pred_region
      _
    $region21: #{tpu_custom_call.1} parent=1 // pred_fallthru
      _
    // Predicated region
    $region22: #{tpu_custom_call.1} parent=1 // pred_check
      _
    $region23: #{tpu_custom_call.1} parent=1 // pred_check_branch
      %25 = sbr.rel (0) target = $region25
    $region24: #{tpu_custom_call.1} parent=1 // pred_region
      _
    $region25: #{tpu_custom_call.1} parent=1 // pred_fallthru
      _
    // Predicated region
    $region26: #{tpu_custom_call.1} parent=1 // pred_check
      _
    $region27: #{tpu_custom_call.1} parent=1 // pred_check_branch
      %27 = sbr.rel (0) target = $region29
    $region28: #{tpu_custom_call.1} parent=1 // pred_region
      _
    $region29: #{tpu_custom_call.1} parent=1 // pred_fallthru
      _
    %v29 = vld [vmem:[%s2] sm:$0xf]
    %v30 = vld [vmem:[%s2 + $0x4] sm:$0xf]
    %v31 = vld [vmem:[%s2 + $0x8] sm:$0xf]
    %v32 = vld [vmem:[%s2 + $0xc] sm:$0xf]
    %v33 = vld [vmem:[%s0] sm:$0xf]
    %v34 = vld [vmem:[%s0 + $0x4] sm:$0xf]
    %v35 = vld [vmem:[%s3] sm:$0xf]
    %v36 = vld [vmem:[%s3 + $0x4] sm:$0xf]
    %v37 = vld [vmem:[%s3 + $0x8] sm:$0xf]
    %v38 = vld [vmem:[%s3 + $0xc] sm:$0xf]
    %v39 = vld [vmem:[%s1] sm:$0x3]
    %v44 = vunpack.c.l.b16 %v35
    %v45 = vunpack.c.l.b16 %v36
    %v46 = vunpack.c.l.b16 %v37
    %v47 = vunpack.c.l.b16 %v38
    %v48 = vpack.c.b16 %v45, %v44
    %v49 = vpack.c.b16 %v47, %v46
    %vm50 = vcmask 31744
    %v52 = vsel %vm50, %v48, 0
    %v55 = vsel %vm50, %v49, 0
    %vm57 = vcmask 1041408
    %v59 = vsel %vm57, %v39, 0
    %61 = vmatprep.subr.bf16.mxu0 0
    %62 = vmatpush1.bf16.msra.mxu0 0
    %63 = vmatprep.subr.bf16.mxu0 0
    %64 = vmatpush1.bf16.msra.mxu0 0
    %65 = vmatprep.subr.bf16.mxu0 0
    %66 = vmatpush1.bf16.msra.mxu0 0
    %67 = vmatprep.subr.bf16.mxu0 0
    %68 = vmatpush1.bf16.msra.mxu0 0
    %69 = vmatprep.subr.bf16.mxu0 0
    %70 = vmatpush1.bf16.msra.mxu0 0
    %71 = vmatprep.subr.bf16.mxu0 0
    %72 = vmatpush1.bf16.msra.mxu0 0
    %73 = vmatprep.subr.bf16.mxu0 0
    %74 = vmatpush1.bf16.msra.mxu0 0
    %75 = vmatprep.subr.bf16.mxu0 0
    %76 = vmatpush1.bf16.msra.mxu0 %v59
    %77 = vmatprep.subr.bf16.mxu0 0
    %78 = vmatpush2.bf16.msra.mxu0 0
    %79 = vmatprep.subr.bf16.mxu0 0
    %80 = vmatpush2.bf16.msra.mxu0 0
    %81 = vmatprep.subr.bf16.mxu0 0
    %82 = vmatpush2.bf16.msra.mxu0 0
    %83 = vmatprep.subr.bf16.mxu0 0
    %84 = vmatpush2.bf16.msra.mxu0 0
    %85 = vmatprep.subr.bf16.mxu0 0
    %86 = vmatpush2.bf16.msra.mxu0 0
    %87 = vmatprep.subr.bf16.mxu0 0
    %88 = vmatpush2.bf16.msra.mxu0 0
    %89 = vmatprep.subr.bf16.mxu0 0
    %90 = vmatpush2.bf16.msra.mxu0 0
    %91 = vmatprep.subr.bf16.mxu0 0
    %92 = vmatpush2.bf16.msra.mxu0 0
    %93 = vmatprep.mubr.bf16.mxu0 0
    %94 = vmatmul.mubr.bf16.gmra.mxu0 %v52
    %v95 = vpop.f32.mrf.mxu0
    %v96 = vadd.f32 0.0, %v95
    %v97 = vpop.f32.mrf.mxu0
    %v98 = vpop.f32.mrf.mxu0
    %v99 = vadd.f32 0.0, %v98
    %v100 = vpop.f32.mrf.mxu0
    %101 = vmatprep.mubr.bf16.mxu0 0
    %102 = vmatmul.mubr.bf16.gmra.mxu0 %v55
    %v103 = vpop.f32.mrf.mxu0
    %v104 = vadd.f32 0.0, %v103
    %v105 = vpop.f32.mrf.mxu0
    %v106 = vpop.f32.mrf.mxu0
    %v107 = vadd.f32 0.0, %v106
    %v108 = vpop.f32.mrf.mxu0
    %109 = vdwg.mxu0
    %v114 = vunpack.c.l.b16 %v29
    %v115 = vunpack.c.l.b16 %v30
    %v116 = vunpack.c.l.b16 %v31
    %v117 = vunpack.c.l.b16 %v32
    %v118 = vpack.c.b16 %v115, %v114
    %v119 = vpack.c.b16 %v117, %v116
    %v122 = vunpack.c.l.b16 %v33
    %v123 = vunpack.c.l.b16 %v34
    %v124 = vpack.c.b16 %v123, %v122
    %vm126 = vcmask 130048
    %v128 = vsel %vm126, %v118, 0
    %v131 = vsel %vm126, %v119, 0
    %133 = vmatprep.subr.bf16.mxu0 0
    %134 = vmatpush1.bf16.msra.mxu0 0
    %135 = vmatprep.subr.bf16.mxu0 0
    %136 = vmatpush1.bf16.msra.mxu0 0
    %137 = vmatprep.subr.bf16.mxu0 0
    %138 = vmatpush1.bf16.msra.mxu0 0
    %139 = vmatprep.subr.bf16.mxu0 0
    %140 = vmatpush1.bf16.msra.mxu0 0
    %141 = vmatprep.subr.bf16.mxu0 0
    %142 = vmatpush1.bf16.msra.mxu0 0
    %143 = vmatprep.subr.bf16.mxu0 0
    %144 = vmatpush1.bf16.msra.mxu0 0
    %145 = vmatprep.subr.bf16.mxu0 0
    %146 = vmatpush1.bf16.msra.mxu0 0
    %147 = vmatprep.subr.bf16.mxu0 0
    %148 = vmatpush1.bf16.msra.mxu0 %v124
    %149 = vmatprep.subr.bf16.mxu0 0
    %150 = vmatpush2.bf16.msra.mxu0 0
    %151 = vmatprep.subr.bf16.mxu0 0
    %152 = vmatpush2.bf16.msra.mxu0 0
    %153 = vmatprep.subr.bf16.mxu0 0
    %154 = vmatpush2.bf16.msra.mxu0 0
    %155 = vmatprep.subr.bf16.mxu0 0
    %156 = vmatpush2.bf16.msra.mxu0 0
    %157 = vmatprep.subr.bf16.mxu0 0
    %158 = vmatpush2.bf16.msra.mxu0 0
    %159 = vmatprep.subr.bf16.mxu0 0
    %160 = vmatpush2.bf16.msra.mxu0 0
    %161 = vmatprep.subr.bf16.mxu0 0
    %162 = vmatpush2.bf16.msra.mxu0 0
    %163 = vmatprep.subr.bf16.mxu0 0
    %164 = vmatpush2.bf16.msra.mxu0 0
    %165 = vmatprep.mubr.bf16.mxu0 0
    %166 = vmatmul.mubr.bf16.gmra.mxu0 %v128
    %v167 = vpop.f32.mrf.mxu0
    %v168 = vadd.f32 %v96, %v167
    %v169 = vpop.f32.mrf.mxu0
    %v170 = vpop.f32.mrf.mxu0
    %v171 = vadd.f32 %v99, %v170
    %v172 = vpop.f32.mrf.mxu0
    %173 = vmatprep.mubr.bf16.mxu0 0
    %174 = vmatmul.mubr.bf16.gmra.mxu0 %v131
    %v175 = vpop.f32.mrf.mxu0
    %v176 = vadd.f32 %v104, %v175
    %v177 = vpop.f32.mrf.mxu0
    %v178 = vpop.f32.mrf.mxu0
    %v179 = vadd.f32 %v107, %v178
    %v180 = vpop.f32.mrf.mxu0
    %181 = vdwg.mxu0
    %v182 = vld [vmem:[%s4] sm:$0xff]
    %v183 = vld [vmem:[%s4 + $0x8] sm:$0xff]
    %v184 = vld [vmem:[%s4 + $0x10] sm:$0xff]
    %v185 = vld [vmem:[%s4 + $0x18] sm:$0xff]
    %187 = vset.pattern.permute.xlu0 0
    %188 = vperm.xlu0 %187, %v182
    %v189 = vpop.permute.xlu0 %188
    %192 = vset.pattern.permute.xlu0 0
    %193 = vperm.xlu0 %192, %v183
    %v194 = vpop.permute.xlu0 %193
    %197 = vset.pattern.permute.xlu0 0
    %198 = vperm.xlu0 %197, %v184
    %v199 = vpop.permute.xlu0 %198
    %202 = vset.pattern.permute.xlu0 0
    %203 = vperm.xlu0 %202, %v185
    %v204 = vpop.permute.xlu0 %203
    %v206 = vadd.f32 %v168, %v189
    %v207 = vadd.f32 %v171, %v194
    %v208 = vadd.f32 %v176, %v199
    %v209 = vadd.f32 %v179, %v204
    %v210 = vmax.f32 %v206, 0.0
    %v211 = vmax.f32 %v207, 0.0
    %v212 = vmax.f32 %v208, 0.0
    %v213 = vmax.f32 %v209, 0.0
    %v214 = vld [vmem:[%s5] sm:$0xff]
    %v215 = vld [vmem:[%s5 + $0x8] sm:$0xff]
    %v216 = vld [vmem:[%s5 + $0x10] sm:$0xff]
    %v217 = vld [vmem:[%s5 + $0x18] sm:$0xff]
    %219 = vset.pattern.permute.xlu0 0
    %220 = vperm.xlu0 %219, %v214
    %v221 = vpop.permute.xlu0 %220
    %224 = vset.pattern.permute.xlu0 0
    %225 = vperm.xlu0 %224, %v215
    %v226 = vpop.permute.xlu0 %225
    %229 = vset.pattern.permute.xlu0 0
    %230 = vperm.xlu0 %229, %v216
    %v231 = vpop.permute.xlu0 %230
    %234 = vset.pattern.permute.xlu0 0
    %235 = vperm.xlu0 %234, %v217
    %v236 = vpop.permute.xlu0 %235
    %v238 = vmul.f32 %v210, %v221
    %v239 = vmul.f32 %v211, %v226
    %v240 = vmul.f32 %v212, %v231
    %v241 = vmul.f32 %v213, %v236
    %vm242 = vcmask 15360
    %v243 = vsel %vm242, %v238, 0.0
    %v244 = vsel %vm242, %v239, 0.0
    %v245 = vadd.f32 %v243, %v244
    %v246 = vsel %vm242, %v240, 0.0
    %v247 = vadd.f32 %v245, %v246
    %v248 = vsel %vm242, %v241, 0.0
    %v249 = vadd.f32 %v247, %v248
    %v250 = vrot.slane %v249, 4
    %v251 = vadd.f32 %v249, %v250
    %v252 = vrot.slane %v251, 2
    %v253 = vadd.f32 %v251, %v252
    %v254 = vrot.slane %v253, 1
    %v255 = vadd.f32 %v253, %v254
    %s256 = sld [smem:[#allocation2]]
    %v257 = vstv %s256
    %v258 = vadd.f32 %v255, %v257
    %vm259 = vcmask 8192
    %260 = vst.msk [vmem:[#allocation3] sm:$0x1] %vm259, %v258
    // Predicated region
    $region30: #{tpu_custom_call.1} parent=1 // pred_check
      _
    $region31: #{tpu_custom_call.1} parent=1 // pred_check_branch
      %262 = sbr.rel (0) target = $region33
    $region32: #{tpu_custom_call.1} parent=1 // pred_region
      %s264 = ssub.s32 16, 16
      %265 = vsyncadd [#allocation4], %s264
      %s267 = sshll.u32 [#allocation3], 4
      %s268 = int_to_ptr.vmem [resolvable:$true] %s267
      %270 = dma.vmem_to_hbm [thread:$0]  %s268, 16, %s7, [#allocation4]
    $region33: #{tpu_custom_call.1} parent=1 // pred_fallthru
      _
    // Predicated region
    $region34: #{tpu_custom_call.1} parent=1 // pred_check
      _
    $region35: #{tpu_custom_call.1} parent=1 // pred_check_branch
      %272 = sbr.rel (0) target = $region37
    $region36: #{tpu_custom_call.1} parent=1 // pred_region
      %273 = dma.done [#allocation4], 16
    $region37: #{tpu_custom_call.1} parent=1 // pred_fallthru
      _
    %274 = vsyncpa [#allocation4], 1

</llo_original>
